<compile_context>
chip_gen: v5e
topology: v5e:2x2
jax: 0.10.0
libtpu: 0.0.40
codegen_flags: <defaults>
</compile_context>

<pallas_src>
import functools

import jax
import jax.numpy as jnp
from jax.experimental import pallas as pl
from jax.experimental.pallas import tpu as pltpu

LANES = 128
SUB_ROWS = 512                      # rows per in-kernel sub-slice / accumulator
TARGET_STEP_BYTES = 8 * 1024 * 1024  # ~8 MiB of input streamed per grid step


def _round_up(x, m):
    return ((x + m - 1) // m) * m


def _dice_kernel(x_ref, t_ref, o_ref, *, rows, block_rows, sub_rows,
                 blocks_per_core, num_cores):
    """Accumulate sum(x*t) and sum(x+t) partials into a per-core output block.

    Grid: (core, row_block).  o_ref block is (1, 2, sub_rows, LANES):
      [0, 0] carries elementwise partials of x*t, [0, 1] of x+t.
    """
    c = pl.program_id(0)   # TensorCore split axis ("parallel")
    i = pl.program_id(1)   # row-block sweep       ("arbitrary", carried output)

    @pl.when(i == 0)
    def _init():
        o_ref[...] = jnp.zeros_like(o_ref)

    n_sub = block_rows // sub_rows

    def accum_sub(j, valid):
        xs = x_ref[j * sub_rows:(j + 1) * sub_rows, :].astype(jnp.float32)
        ts = t_ref[j * sub_rows:(j + 1) * sub_rows, :].astype(jnp.float32)
        prod = xs * ts
        both = xs + ts
        if valid < sub_rows:
            # Static threshold: only ever traced for the tail block.
            keep = jax.lax.broadcasted_iota(jnp.int32, (sub_rows, LANES), 0) < valid
            prod = jnp.where(keep, prod, 0.0)
            both = jnp.where(keep, both, 0.0)
        o_ref[0, 0, :, :] += prod
        o_ref[0, 1, :, :] += both

    num_blocks = blocks_per_core * num_cores
    tail_rows = rows - (num_blocks - 1) * block_rows   # valid rows in last block

    if tail_rows == block_rows:
        # Every block is full: no masking anywhere (static decision).
        for j in range(n_sub):
            accum_sub(j, sub_rows)
    else:
        # Only the globally-last block is partial; pay the mask only there.
        is_tail = jnp.logical_and(c == num_cores - 1, i == blocks_per_core - 1)

        @pl.when(jnp.logical_not(is_tail))
        def _full_blocks():
            for j in range(n_sub):
                accum_sub(j, sub_rows)

        @pl.when(is_tail)
        def _tail_block():
            for j in range(n_sub):
                v = min(sub_rows, tail_rows - j * sub_rows)
                if v > 0:           # skip fully-padded sub-slices entirely
                    accum_sub(j, v)


def _dice_partial_sums(x2, t2, block_cap=None):
    """Run the streaming kernel on a (rows, 128) view; return (inter, denom) sums."""
    rows = x2.shape[0]

    # Dtype-aware tile sizing: ~TARGET_STEP_BYTES of input per grid step.
    bytes_per_row = LANES * (x2.dtype.itemsize + t2.dtype.itemsize)
    max_block_rows = max(SUB_ROWS,
                         (TARGET_STEP_BYTES // bytes_per_row) // SUB_ROWS * SUB_ROWS)
    if block_cap is not None:   # test hook: force small multi-block grids
        max_block_rows = max(SUB_ROWS, (min(max_block_rows, block_cap)
                                        // SUB_ROWS) * SUB_ROWS)

    if rows <= SUB_ROWS:
        block_rows = _round_up(rows, 8)
        sub_rows = block_rows
    else:
        block_rows = min(max_block_rows, _round_up(rows, SUB_ROWS))
        sub_rows = SUB_ROWS

    num_blocks = pl.cdiv(rows, block_rows)

    # v7x: split the sweep across the 2 TensorCores (leading "parallel" axis).
    # Harmless (serial) on v5e/v6e.  Block count is made even so both cores get
    # identical sweeps and no block is ever fully out of bounds.
    num_cores = 2 if num_blocks >= 2 else 1
    if num_cores == 2 and num_blocks % 2:
        block_rows = max(sub_rows,
                         _round_up(pl.cdiv(rows, num_blocks + 1), sub_rows))
        num_blocks = pl.cdiv(rows, block_rows)
        if num_blocks % 2:
            num_cores = 1
    blocks_per_core = num_blocks // num_cores

    kernel = functools.partial(
        _dice_kernel, rows=rows, block_rows=block_rows, sub_rows=sub_rows,
        blocks_per_core=blocks_per_core, num_cores=num_cores)

    # VMEM budget: 2x double-buffered input blocks + output partials + slack,
    # capped so it stays v7x-safe (64 MiB physical per core).
    in_block_bytes = block_rows * LANES * (x2.dtype.itemsize + t2.dtype.itemsize)
    out_block_bytes = 2 * sub_rows * LANES * 4
    vmem_limit = max(16 * 1024 * 1024,
                     min(48 * 1024 * 1024,
                         2 * in_block_bytes + 2 * out_block_bytes + 8 * 1024 * 1024))

    partials = pl.pallas_call(
        kernel,
        out_shape=jax.ShapeDtypeStruct((num_cores, 2, sub_rows, LANES), jnp.float32),
        grid_spec=pltpu.PrefetchScalarGridSpec(
            num_scalar_prefetch=0,
            grid=(num_cores, blocks_per_core),
            in_specs=[
                pl.BlockSpec((block_rows, LANES),
                             lambda c, i: (c * blocks_per_core + i, 0)),
                pl.BlockSpec((block_rows, LANES),
                             lambda c, i: (c * blocks_per_core + i, 0)),
            ],
            out_specs=pl.BlockSpec((1, 2, sub_rows, LANES),
                                   lambda c, i: (c, 0, 0, 0)),
        ),
        compiler_params=pltpu.CompilerParams(
            dimension_semantics=("parallel", "arbitrary"),
            vmem_limit_bytes=int(vmem_limit),
        ),
    )(x2, t2)

    inter = jnp.sum(partials[:, 0])
    denom = jnp.sum(partials[:, 1])
    return inter, denom


@functools.partial(jax.jit, static_argnames=("block_cap",))
def dice_loss(inputs, targets, smooth=1.0, block_cap=None):
    """Pallas TPU implementation of DiceLoss.forward."""
    x = jnp.ravel(inputs)      # free metadata reshape, no copy, no dtype cast
    t = jnp.ravel(targets)
    n = x.shape[0]
    n_main = (n // LANES) * LANES

    inter = jnp.float32(0.0)
    denom = jnp.float32(0.0)

    if n_main != n:
        # <128-element tail: tiny jnp reduction in the wrapper (no full-array pad).
        tx = x[n_main:].astype(jnp.float32)
        tt = t[n_main:].astype(jnp.float32)
        inter = inter + jnp.sum(tx * tt)
        denom = denom + jnp.sum(tx) + jnp.sum(tt)

    if n_main > 0:
        # TODO(synk): when n % 128 != 0 the prefix slice may still materialize a
        # copy in XLA; a fully copy-free path needs a 1-D-blocked kernel input
        # (awkward in Mosaic).  The aligned common case is copy-free.
        x2 = x[:n_main].reshape(n_main // LANES, LANES)
        t2 = t[:n_main].reshape(n_main // LANES, LANES)
        k_inter, k_denom = _dice_partial_sums(x2, t2, block_cap)
        inter = inter + k_inter
        denom = denom + k_denom

    smooth = jnp.asarray(smooth, jnp.float32)
    return 1.0 - (2.0 * inter + smooth) / (denom + smooth)


def dice_loss_ref(inputs, targets, smooth=1.0):
    x = jnp.ravel(inputs).astype(jnp.float32)
    t = jnp.ravel(targets).astype(jnp.float32)
    inter = jnp.sum(x * t)
    dice = (2.0 * inter + smooth) / (jnp.sum(x) + jnp.sum(t) + smooth)
    return 1.0 - dice


if __name__ == "__main__":
    key = jax.random.PRNGKey(0)
    k1, k2, k3, k4, k5, k6, k7, k8 = jax.random.split(key, 8)

    # Test 1: small NCHW f32 (n multiple of 128, single block, no mask).
    inputs = jax.nn.sigmoid(jax.random.normal(k1, (2, 4, 16, 16), dtype=jnp.float32))
    targets = (jax.random.uniform(k2, (2, 4, 16, 16)) > 0.5).astype(jnp.float32)
    out = jax.block_until_ready(dice_loss(inputs, targets, smooth=1.0))
    ref = dice_loss_ref(inputs, targets, smooth=1.0)
    assert jnp.allclose(out, ref, rtol=1e-5, atol=1e-6), (out, ref)

    # Test 2: bf16 inputs, multiple sub-slices + masked partial row tail.
    inputs2 = jax.nn.sigmoid(
        jax.random.normal(k3, (2, 8, 160, 160), dtype=jnp.float32)).astype(jnp.bfloat16)
    targets2 = (jax.random.uniform(k4, (2, 8, 160, 160)) > 0.5).astype(jnp.float32)
    out2 = jax.block_until_ready(dice_loss(inputs2, targets2, smooth=1.0))
    ref2 = dice_loss_ref(inputs2, targets2, smooth=1.0)
    assert jnp.allclose(out2, ref2, rtol=1e-4, atol=1e-5), (out2, ref2)

    # Test 3: element count not a multiple of 128 (wrapper tail path).
    inputs3 = jax.nn.sigmoid(jax.random.normal(k5, (3, 5, 7, 11), dtype=jnp.float32))
    targets3 = (jax.random.uniform(k6, (3, 5, 7, 11)) > 0.5).astype(jnp.float32)
    out3 = jax.block_until_ready(dice_loss(inputs3, targets3, smooth=1.0))
    ref3 = dice_loss_ref(inputs3, targets3, smooth=1.0)
    assert jnp.allclose(out3, ref3, rtol=1e-5, atol=1e-6), (out3, ref3)

    # Test 4: force the 2-core / multi-block / masked-tail path with small data
    # by capping the block size (block_cap is a test-only static knob).
    inputs4 = jax.nn.sigmoid(jax.random.normal(k7, (2, 4, 80, 128), dtype=jnp.float32))
    targets4 = (jax.random.uniform(k8, (2, 4, 80, 128)) > 0.5).astype(jnp.float32)
    out4 = jax.block_until_ready(dice_loss(inputs4, targets4, smooth=1.0, block_cap=512))
    ref4 = dice_loss_ref(inputs4, targets4, smooth=1.0)
    assert jnp.allclose(out4, ref4, rtol=1e-5, atol=1e-6), (out4, ref4)

    print("KERNEL_OK")
</pallas_src>

<mosaic_0001>
module attributes {stable_mosaic.version = 11 : i64} {
  func.func @_dice_kernel(%arg0: i32, %arg1: i32, %arg2: memref<16x128xf32, #tpu.memory_space<vmem>>, %arg3: memref<16x128xf32, #tpu.memory_space<vmem>>, %arg4: memref<1x2x16x128xf32, #tpu.memory_space<vmem>>) attributes {dimension_semantics = [#tpu.dimension_semantics<parallel>, #tpu.dimension_semantics<arbitrary>], iteration_bounds = array<i64: 1, 1>, scalar_prefetch = 0 : i64, scratch_operands = 0 : i64, tpu.core_type = #tpu.core_type<tc>, window_params = [{transform_indices = @transform_0, window_bounds = array<i64: 16, 128>}, {transform_indices = @transform_1, window_bounds = array<i64: 16, 128>}, {transform_indices = @transform_2, window_bounds = array<i64: 1, 2, 16, 128>}]} {
    %c0_i32 = arith.constant 0 : i32
    %0 = arith.cmpi eq, %arg1, %c0_i32 : i32
    %1 = arith.extui %0 : i1 to i32
    %c0_i32_0 = arith.constant 0 : i32
    %2 = arith.cmpi ne, %1, %c0_i32_0 : i32
    scf.if %2 {
      %cst = arith.constant 0.000000e+00 : f32
      %19 = vector.broadcast %cst : f32 to vector<1x2x16x128xf32>
      %c0_19 = arith.constant 0 : index
      %c0_20 = arith.constant 0 : index
      %c0_21 = arith.constant 0 : index
      %c0_22 = arith.constant 0 : index
      %20 = vector.load %arg4[%c0_19, %c0_20, %c0_21, %c0_22] : memref<1x2x16x128xf32, #tpu.memory_space<vmem>>, vector<1x2x16x128xf32>
      tpu.vector_store %arg4[%c0_19, %c0_20, %c0_21, %c0_22], %19 {strides = array<i32>} : memref<1x2x16x128xf32, #tpu.memory_space<vmem>>, vector<1x2x16x128xf32>,
    } else {
    }
    %c0 = arith.constant 0 : index
    %c0_1 = arith.constant 0 : index
    %3 = vector.load %arg2[%c0, %c0_1] : memref<16x128xf32, #tpu.memory_space<vmem>>, vector<16x128xf32>
    %c0_2 = arith.constant 0 : index
    %c0_3 = arith.constant 0 : index
    %4 = vector.load %arg3[%c0_2, %c0_3] : memref<16x128xf32, #tpu.memory_space<vmem>>, vector<16x128xf32>
    %5 = arith.mulf %3, %4 : vector<16x128xf32>
    %6 = arith.addf %3, %4 : vector<16x128xf32>
    %c0_4 = arith.constant 0 : index
    %c0_5 = arith.constant 0 : index
    %c0_6 = arith.constant 0 : index
    %c0_7 = arith.constant 0 : index
    %7 = vector.load %arg4[%c0_4, %c0_5, %c0_6, %c0_7] : memref<1x2x16x128xf32, #tpu.memory_space<vmem>>, vector<1x1x16x128xf32>
    %8 = vector.shape_cast %7 : vector<1x1x16x128xf32> to vector<16x128xf32>
    %9 = arith.addf %8, %5 : vector<16x128xf32>
    %c0_8 = arith.constant 0 : index
    %c0_9 = arith.constant 0 : index
    %c0_10 = arith.constant 0 : index
    %c0_11 = arith.constant 0 : index
    %10 = vector.load %arg4[%c0_8, %c0_9, %c0_10, %c0_11] : memref<1x2x16x128xf32, #tpu.memory_space<vmem>>, vector<1x1x16x128xf32>
    %11 = vector.shape_cast %10 : vector<1x1x16x128xf32> to vector<16x128xf32>
    %12 = vector.shape_cast %9 : vector<16x128xf32> to vector<1x1x16x128xf32>
    tpu.vector_store %arg4[%c0_8, %c0_9, %c0_10, %c0_11], %12 {strides = array<i32>} : memref<1x2x16x128xf32, #tpu.memory_space<vmem>>, vector<1x1x16x128xf32>,
    %c0_12 = arith.constant 0 : index
    %c1 = arith.constant 1 : index
    %c0_13 = arith.constant 0 : index
    %c0_14 = arith.constant 0 : index
    %13 = vector.load %arg4[%c0_12, %c1, %c0_13, %c0_14] : memref<1x2x16x128xf32, #tpu.memory_space<vmem>>, vector<1x1x16x128xf32>
    %14 = vector.shape_cast %13 : vector<1x1x16x128xf32> to vector<16x128xf32>
    %15 = arith.addf %14, %6 : vector<16x128xf32>
    %c0_15 = arith.constant 0 : index
    %c1_16 = arith.constant 1 : index
    %c0_17 = arith.constant 0 : index
    %c0_18 = arith.constant 0 : index
    %16 = vector.load %arg4[%c0_15, %c1_16, %c0_17, %c0_18] : memref<1x2x16x128xf32, #tpu.memory_space<vmem>>, vector<1x1x16x128xf32>
    %17 = vector.shape_cast %16 : vector<1x1x16x128xf32> to vector<16x128xf32>
    %18 = vector.shape_cast %15 : vector<16x128xf32> to vector<1x1x16x128xf32>
    tpu.vector_store %arg4[%c0_15, %c1_16, %c0_17, %c0_18], %18 {strides = array<i32>} : memref<1x2x16x128xf32, #tpu.memory_space<vmem>>, vector<1x1x16x128xf32>,
    return
  }
  func.func @transform_0(%arg0: i32, %arg1: i32) -> (i32, i32) {
    %c1_i32 = arith.constant 1 : i32
    %0 = arith.muli %arg0, %c1_i32 : i32
    %1 = arith.addi %0, %arg1 : i32
    %c0_i32 = arith.constant 0 : i32
    %c0_i32_0 = arith.constant 0 : i32
    return %1, %c0_i32 : i32, i32
  }
  func.func @transform_1(%arg0: i32, %arg1: i32) -> (i32, i32) {
    %c1_i32 = arith.constant 1 : i32
    %0 = arith.muli %arg0, %c1_i32 : i32
    %1 = arith.addi %0, %arg1 : i32
    %c0_i32 = arith.constant 0 : i32
    %c0_i32_0 = arith.constant 0 : i32
    return %1, %c0_i32 : i32, i32
  }
  func.func @transform_2(%arg0: i32, %arg1: i32) -> (i32, i32, i32, i32) {
    %c0_i32 = arith.constant 0 : i32
    %c0_i32_0 = arith.constant 0 : i32
    %c0_i32_1 = arith.constant 0 : i32
    %c0_i32_2 = arith.constant 0 : i32
    return %arg0, %c0_i32, %c0_i32_0, %c0_i32_1 : i32, i32, i32, i32
  }
}

</mosaic_0001>

<llo_original>
// kernel: dice_loss.1
$region0: #{dice_loss.1}
  #allocation0 [shape = 'u32[]', space=smem, size = 0x4, offset = 0x4, fixed_abs, tag = 'smem constant byte address 0x4 - core index']
  #allocation1 [shape = 'u32[72,128]{1,0:T(1,128)}', space=vmem, size = 0x9000, scoped, tag = 'internal scratch']
  %s0 = inlined_call_operand.vmem [shape: f32[16,128], index: 0, kind: input, shape index: {}]
  %s1 = inlined_call_operand.vmem [shape: f32[16,128], index: 1, kind: input, shape index: {}]
  %s2 = inlined_call_operand.vmem [shape: f32[1,2,16,128], index: 2, kind: output, shape index: {}]
  %s3 = sld [smem:[#allocation0]]
  $region22: #{dice_loss.1} parent=0
    _
  %s5 = ssub.s32 1, %s3
  %s6 = scalar_select 0, %s5, %s3
  // Predicated region
  $region2: #{dice_loss.1} parent=0 // pred_check
    _
  $region3: #{dice_loss.1} parent=0 // pred_check_branch
    %8 = sbr.rel (0) target = $region5
  $region4: #{dice_loss.1} parent=0 // pred_region
    %s9 = sadd.s32 0, 0
    %s10 = smul.u32 2, %s9
    %p11 = scmp.lt.s32.totalorder %s10, 1
    %s12 = scalar_select %p11, %s10, 1
    %s13 = smul.addr %s12, 8
    %s14 = scalar_lea.vmem %s0, %s13
    %s15 = sadd.s32 0, 0
    %s16 = smul.u32 2, %s15
  $region5: #{dice_loss.1} parent=0 // pred_fallthru
    _
  // Predicated region
  $region6: #{dice_loss.1} parent=0 // pred_check
    _
  $region7: #{dice_loss.1} parent=0 // pred_check_branch
    %18 = sbr.rel (0) target = $region9
  $region8: #{dice_loss.1} parent=0 // pred_region
    %s19 = sadd.s32 0, 0
    %s20 = smul.u32 2, %s19
    %p21 = scmp.lt.s32.totalorder %s20, 1
    %s22 = scalar_select %p21, %s20, 1
    %s23 = smul.addr %s22, 8
    %s24 = scalar_lea.vmem %s1, %s23
    %s25 = sadd.s32 0, 0
    %s26 = smul.u32 2, %s25
  $region9: #{dice_loss.1} parent=0 // pred_fallthru
    _
  %s27 = sadd.s32 0, 0
  %s28 = smul.u32 2, %s27
  %p29 = scmp.lt.s32.totalorder %s28, 1
  %s30 = scalar_select %p29, %s28, 1
  %s31 = smul.addr %s30, 8
  %s32 = scalar_lea.vmem %s0, %s31
  %s33 = sadd.s32 0, 0
  %s34 = smul.u32 2, %s33
  %p35 = scmp.lt.s32.totalorder %s34, 1
  %s36 = scalar_select %p35, %s34, 1
  %s37 = smul.addr %s36, 8
  %s38 = scalar_lea.vmem %s1, %s37
  %s39 = sadd.s32 0, 0
  %s40 = smul.u32 2, %s39
  %p41 = scmp.lt.s32.totalorder %s40, 1
  %s42 = scalar_select %p41, %s40, 1
  %s43 = smul.addr %s42, 8
  %s44 = scalar_lea.vmem %s0, %s43
  %s45 = sadd.s32 0, 0
  %s46 = smul.u32 2, %s45
  %s47 = sadd.s32 0, 0
  %s48 = smul.u32 2, %s47
  %p49 = scmp.lt.s32.totalorder %s48, 1
  %s50 = scalar_select %p49, %s48, 1
  %s51 = smul.addr %s50, 8
  %s52 = scalar_lea.vmem %s1, %s51
  %s53 = sadd.s32 0, 0
  %s54 = smul.u32 2, %s53
  %p55 = scmp.eq.s32.totalorder 0, 0
  // Predicated region
  $region10: #{dice_loss.1} parent=0 // pred_check
    %p56 = pneg %p55
  $region11: #{dice_loss.1} parent=0 // pred_check_branch
    %58 = sbr.rel (%p56) target = $region13
  $region12: #{dice_loss.1} parent=0 // pred_region
    %59 = vst [vmem:[%s2] sm:$0xff] 0.0
    %60 = vst [vmem:[%s2 + $0x8] sm:$0xff] 0.0
    %61 = vst [vmem:[%s2 + $0x10] sm:$0xff] 0.0
    %62 = vst [vmem:[%s2 + $0x18] sm:$0xff] 0.0
  $region13: #{dice_loss.1} parent=0 // pred_fallthru
    _
  %v63 = vld [vmem:[%s44] sm:$0xff]
  %v64 = vld [vmem:[%s44 + $0x8] sm:$0xff]
  %v65 = vld [vmem:[%s52] sm:$0xff]
  %v66 = vld [vmem:[%s52 + $0x8] sm:$0xff]
  %v67 = vmul.f32 %v63, %v65
  %v68 = vmul.f32 %v64, %v66
  %v69 = vadd.f32 %v63, %v65
  %v70 = vadd.f32 %v64, %v66
  %v71 = vld [vmem:[%s2] sm:$0xff]
  %v72 = vld [vmem:[%s2 + $0x8] sm:$0xff]
  %v73 = vadd.f32 %v71, %v67
  %v74 = vadd.f32 %v72, %v68
  %75 = vst [vmem:[%s2] sm:$0xff] %v73
  %76 = vst [vmem:[%s2 + $0x8] sm:$0xff] %v74
  %s77 = scalar_lea.vmem %s2, 16
  %v78 = vld [vmem:[%s77] sm:$0xff]
  %v79 = vld [vmem:[%s77 + $0x8] sm:$0xff]
  %v80 = vadd.f32 %v78, %v69
  %v81 = vadd.f32 %v79, %v70
  %82 = vst [vmem:[%s77] sm:$0xff] %v80
  %83 = vst [vmem:[%s77 + $0x8] sm:$0xff] %v81
  // Predicated region
  $region14: #{dice_loss.1} parent=0 // pred_check
    _
  $region15: #{dice_loss.1} parent=0 // pred_check_branch
    %85 = sbr.rel (0) target = $region17
  $region16: #{dice_loss.1} parent=0 // pred_region
    _
  $region17: #{dice_loss.1} parent=0 // pred_fallthru
    _
  // Predicated region
  $region18: #{dice_loss.1} parent=0 // pred_check
    _
  $region19: #{dice_loss.1} parent=0 // pred_check_branch
    %87 = sbr.rel (0) target = $region21
  $region20: #{dice_loss.1} parent=0 // pred_region
    _
  $region21: #{dice_loss.1} parent=0 // pred_fallthru
    _

</llo_original>
